<compile_context>
chip_gen: v7x
topology: tpu7x:2x2x1
jax: 0.10.0
libtpu: 0.0.40
codegen_flags: <defaults>
</compile_context>

<pallas_src>
import functools
import math

import jax
import jax.numpy as jnp
from jax import lax
from jax.experimental import pallas as pl
from jax.experimental.pallas import tpu as pltpu

F32_MIN = float(jnp.finfo(jnp.float32).min)


# --------------------------------------------------------------------- helpers
def _mxu_dtypes():
    """MXU operand / accumulator dtypes per TPU generation.

    v5e / v6e: native int8 x int8 -> int32 (exact, matches torch._int_mm).
    v7x:       no integer MXU -> dequantize tiles to bf16, accumulate in f32.
    """
    try:
        kind = jax.devices()[0].device_kind.lower()
    except Exception:
        kind = ""
    if "v7" in kind or "tpu7" in kind:
        return jnp.bfloat16, jnp.float32
    return jnp.int8, jnp.int32


def _pick_tile(dim, candidates):
    """Largest candidate tile that divides dim; else the full dim (small test shapes)."""
    for c in candidates:
        if dim >= c and dim % c == 0:
            return c
    return dim


# --------------------------------------------- RMSNorm + activation quantization
def _rmsnorm_quant_kernel(x_ref, w_ref, o_ref, *, eps, inv_scale):
    x = x_ref[...]                                       # (tm, H) f32
    var = jnp.mean(x * x, axis=-1, keepdims=True)
    normed = w_ref[...] * (x * lax.rsqrt(var + eps))
    o_ref[...] = jnp.clip(jnp.round(normed * inv_scale), -128.0, 127.0).astype(jnp.int8)


def rmsnorm_quant(x2d, weight, eps, act_scale):
    M, H = x2d.shape
    tm = _pick_tile(M, (256, 128))
    return pl.pallas_call(
        functools.partial(_rmsnorm_quant_kernel, eps=eps, inv_scale=1.0 / act_scale),
        out_shape=jax.ShapeDtypeStruct((M, H), jnp.int8),
        grid=(M // tm,),
        in_specs=[pl.BlockSpec((tm, H), lambda i: (i, 0)),
                  pl.BlockSpec((1, H), lambda i: (0, 0))],
        out_specs=pl.BlockSpec((tm, H), lambda i: (i, 0)),
        compiler_params=pltpu.CompilerParams(dimension_semantics=("parallel",)),
    )(x2d, weight.reshape(1, -1))


# ----------------------------------------------------- tiled W8A8 int8 matmul
def _int8_matmul_kernel(x_ref, w_ref, scale_ref, bias_ref, *refs,
                        op_dtype, acc_dtype, quant_inv_scale, has_residual):
    if has_residual:
        res_ref, o_ref, acc_ref = refs
    else:
        o_ref, acc_ref = refs

    @pl.when(pl.program_id(2) == 0)
    def _init():
        acc_ref[...] = jnp.zeros_like(acc_ref)

    x = x_ref[...]
    if quant_inv_scale is not None:
        # fused per-tensor activation quantization (fp32 input path, e.g. o_proj)
        x = jnp.clip(jnp.round(x * quant_inv_scale), -128.0, 127.0).astype(jnp.int8)

    acc_ref[...] += lax.dot_general(
        x.astype(op_dtype), w_ref[...].astype(op_dtype),
        (((1,), (0,)), ((), ())),
        preferred_element_type=acc_dtype)

    @pl.when(pl.program_id(2) == pl.num_programs(2) - 1)
    def _store():
        out = acc_ref[...].astype(jnp.float32) * scale_ref[...] + bias_ref[...]
        if has_residual:
            out = out + res_ref[...]                     # fused residual add epilogue
        o_ref[...] = out


def int8_matmul(x, w_t, scale_row, bias_row, residual=None, quant_scale=None):
    """x: (M, K) int8 (or f32 when quant_scale is given); w_t: (K, N) int8 pre-transposed.
    Output: (M, N) f32 = dequant(int_mm) * scale_row + bias_row [+ residual]."""
    M, K = x.shape
    Kw, N = w_t.shape
    assert K == Kw
    op_dtype, acc_dtype = _mxu_dtypes()

    tm = _pick_tile(M, (256, 128))
    tn = _pick_tile(N, (512, 256, 128))
    tk = _pick_tile(K, (512, 256, 128))
    grid = (M // tm, N // tn, K // tk)

    in_specs = [
        pl.BlockSpec((tm, tk), lambda i, j, k: (i, k)),
        pl.BlockSpec((tk, tn), lambda i, j, k: (k, j)),
        pl.BlockSpec((1, tn), lambda i, j, k: (0, j)),
        pl.BlockSpec((1, tn), lambda i, j, k: (0, j)),
    ]
    args = [x, w_t, scale_row, bias_row]
    if residual is not None:
        in_specs.append(pl.BlockSpec((tm, tn), lambda i, j, k: (i, j)))
        args.append(residual)

    kernel = functools.partial(
        _int8_matmul_kernel, op_dtype=op_dtype, acc_dtype=acc_dtype,
        quant_inv_scale=(None if quant_scale is None else 1.0 / quant_scale),
        has_residual=residual is not None)

    # Rough VMEM budget (double-buffered inputs + resident out/acc); only raise the
    # scoped limit when the tile plan actually needs it (keeps v7x's 64 MiB safe).
    est = (2 * (tm * tk * x.dtype.itemsize + tk * tn + 2 * tn * 4
                + (tm * tn * 4 if residual is not None else 0))
           + tm * tn * 4 + tm * tn * jnp.dtype(acc_dtype).itemsize)
    vmem_limit = int(min(1.5 * est, 60 * 1024 * 1024)) if est > 28 * 1024 * 1024 else None

    return pl.pallas_call(
        kernel,
        out_shape=jax.ShapeDtypeStruct((M, N), jnp.float32),
        grid=grid,
        in_specs=in_specs,
        out_specs=pl.BlockSpec((tm, tn), lambda i, j, k: (i, j)),
        scratch_shapes=[pltpu.VMEM((tm, tn), acc_dtype)],
        compiler_params=pltpu.CompilerParams(
            dimension_semantics=("parallel", "parallel", "arbitrary"),
            vmem_limit_bytes=vmem_limit),
    )(*args)


# ---------------------------------------------- attention core (RoPE + softmax)
def _attn_kernel(q_ref, k_ref, v_ref, cos_ref, sin_ref, mask_ref, o_ref, *, head_dim):
    half = head_dim // 2
    q = q_ref[...]                                       # (S, D) f32
    k = k_ref[...]
    cos = cos_ref[...]
    sin_s = sin_ref[...]                                 # sign-folded sin table

    # rotate_half(x) == roll(x, D/2, lanes) * sign; sign is folded into sin_s -> XLU only.
    qr = (q * cos + pltpu.roll(q, shift=half, axis=1) * sin_s).astype(jnp.bfloat16)
    kr = (k * cos + pltpu.roll(k, shift=half, axis=1) * sin_s).astype(jnp.bfloat16)

    scores = lax.dot_general(qr, kr, (((1,), (1,)), ((), ())),
                             preferred_element_type=jnp.float32)
    scores = scores * (1.0 / math.sqrt(head_dim)) + mask_ref[0]
    scores = jnp.maximum(scores, F32_MIN)

    m = jnp.max(scores, axis=-1, keepdims=True)          # f32 softmax (matches reference)
    e = jnp.exp(scores - m)
    denom = jnp.sum(e, axis=-1, keepdims=True)
    probs = (e * pl.reciprocal(denom, approx=True)).astype(jnp.bfloat16)

    o_ref[...] = jnp.dot(probs, v_ref[...].astype(jnp.bfloat16),
                         preferred_element_type=jnp.float32)


def attention_core(qkv, cos_g, sin_sg, mask3, B, S, nH, D):
    """qkv: (B*S, 3H) f32 from the fused QKV projection; output (B*S, H) f32.
    Heads are contiguous D-wide column slabs, so no head transposes are needed."""
    H = nH * D
    spec_q = pl.BlockSpec((S, D), lambda b, h: (b, h))
    spec_k = pl.BlockSpec((S, D), lambda b, h: (b, nH + h))
    spec_v = pl.BlockSpec((S, D), lambda b, h: (b, 2 * nH + h))
    spec_cs = pl.BlockSpec((S, D), lambda b, h: (0, 0))
    spec_mask = pl.BlockSpec((1, S, S), lambda b, h: (b, 0, 0))
    return pl.pallas_call(
        functools.partial(_attn_kernel, head_dim=D),
        out_shape=jax.ShapeDtypeStruct((B * S, H), jnp.float32),
        grid=(B, nH),
        in_specs=[spec_q, spec_k, spec_v, spec_cs, spec_cs, spec_mask],
        out_specs=pl.BlockSpec((S, D), lambda b, h: (b, h)),
        compiler_params=pltpu.CompilerParams(
            dimension_semantics=("parallel", "parallel")),
    )(qkv, qkv, qkv, cos_g, sin_sg, mask3)


# ---------------------------------------- SiLU(gate) * up + quantization -> int8
def _silu_gate_quant_kernel(g_ref, u_ref, o_ref, *, inv_scale):
    g = g_ref[...]
    h = (g * jax.nn.sigmoid(g)) * u_ref[...]             # SiLU(gate) * up
    o_ref[...] = jnp.clip(jnp.round(h * inv_scale), -128.0, 127.0).astype(jnp.int8)


def silu_gate_quant(gate_up, inter, act_scale):
    M, two_i = gate_up.shape
    assert two_i == 2 * inter
    tm = _pick_tile(M, (256, 128))
    ti = _pick_tile(inter, (512, 256, 128))
    n_i = inter // ti
    return pl.pallas_call(
        functools.partial(_silu_gate_quant_kernel, inv_scale=1.0 / act_scale),
        out_shape=jax.ShapeDtypeStruct((M, inter), jnp.int8),
        grid=(M // tm, n_i),
        in_specs=[pl.BlockSpec((tm, ti), lambda i, j: (i, j)),
                  pl.BlockSpec((tm, ti), lambda i, j: (i, n_i + j))],
        out_specs=pl.BlockSpec((tm, ti), lambda i, j: (i, j)),
        compiler_params=pltpu.CompilerParams(
            dimension_semantics=("parallel", "parallel")),
    )(gate_up, gate_up)


# ---------------------------------------------------------- decoder layer forward
def decoder_layer_forward(params, hidden_states, attention_mask, position_ids):
    B, S, H = hidden_states.shape
    nH = params["num_heads"]
    D = H // nH
    eps = params["eps"]

    x2d = hidden_states.reshape(B * S, H)

    # --- self attention block: fused RMSNorm+quant, fused QKV matmul ---
    xq8 = rmsnorm_quant(x2d, params["input_ln_w"], eps, params["attn_in_scale"])
    qkv = int8_matmul(xq8, params["wqkv_t"], params["qkv_scale"], params["qkv_bias"])

    cos_g = params["cos"][position_ids]                   # (S, D)
    sin_sg = params["sin_rot"][position_ids]              # (S, D), sign-folded
    mask3 = attention_mask.reshape(B, S, S)                # (B,1,S,S) -> (B,S,S)

    attn = attention_core(qkv, cos_g, sin_sg, mask3, B, S, nH, D)   # (B*S, H) f32

    # o_proj: fused activation quant + dequant + bias + residual add epilogue
    resid1 = int8_matmul(attn, params["wo_t"], params["o_scale"], params["o_bias"],
                         residual=x2d, quant_scale=params["out_in_scale"])

    # --- MLP block: fused gate|up matmul, fused SiLU*up+quant, down_proj + residual ---
    hq8 = rmsnorm_quant(resid1, params["post_ln_w"], eps, params["mlp_in_scale"])
    gate_up = int8_matmul(hq8, params["wgu_t"], params["gu_scale"], params["gu_bias"])
    hidden8 = silu_gate_quant(gate_up, params["inter"], params["down_in_scale"])
    out = int8_matmul(hidden8, params["wd_t"], params["d_scale"], params["d_bias"],
                      residual=resid1)

    return out.reshape(B, S, H)


# --------------------------------------------------------------------- setup
def make_params(key, hidden, n_heads, inter, max_pos):
    head_dim = hidden // n_heads
    ks = jax.random.split(key, 8)

    def int8_w(k, out_f, in_f):
        return jax.random.randint(k, (out_f, in_f), -127, 128, dtype=jnp.int32).astype(jnp.int8)

    wq = int8_w(ks[0], hidden, hidden)
    wk = int8_w(ks[1], hidden, hidden)
    wv = int8_w(ks[2], hidden, hidden)
    wo = int8_w(ks[3], hidden, hidden)
    wg = int8_w(ks[4], inter, hidden)
    wu = int8_w(ks[5], inter, hidden)
    wd = int8_w(ks[6], hidden, inter)

    bq = bk = bv = bo = jnp.zeros((hidden,), jnp.float32)
    bg = bu = jnp.zeros((inter,), jnp.float32)
    bd = jnp.zeros((hidden,), jnp.float32)

    attn_in_scale, out_in_scale = 0.05, 0.05
    wq_s = wk_s = wv_s = wo_s = 0.02
    mlp_in_scale, down_in_scale = 0.05, 0.05
    wg_s = wu_s = wd_s = 0.02

    # --- one-time weight prep: transpose to [K, N] and fuse QKV / gate|up ---
    wqkv_t = jnp.concatenate([wq.T, wk.T, wv.T], axis=1)        # (H, 3H) int8
    wgu_t = jnp.concatenate([wg.T, wu.T], axis=1)               # (H, 2I) int8
    wo_t = wo.T                                                 # (H, H)  int8
    wd_t = wd.T                                                 # (I, H)  int8

    qkv_scale = jnp.concatenate([
        jnp.full((hidden,), attn_in_scale * wq_s, jnp.float32),
        jnp.full((hidden,), attn_in_scale * wk_s, jnp.float32),
        jnp.full((hidden,), attn_in_scale * wv_s, jnp.float32)]).reshape(1, -1)
    qkv_bias = jnp.concatenate([bq, bk, bv]).reshape(1, -1)
    o_scale = jnp.full((1, hidden), out_in_scale * wo_s, jnp.float32)
    gu_scale = jnp.concatenate([
        jnp.full((inter,), mlp_in_scale * wg_s, jnp.float32),
        jnp.full((inter,), mlp_in_scale * wu_s, jnp.float32)]).reshape(1, -1)
    gu_bias = jnp.concatenate([bg, bu]).reshape(1, -1)
    d_scale = jnp.full((1, hidden), down_in_scale * wd_s, jnp.float32)

    # rotary tables (LlamaRotaryEmbedding)
    inv_freq = 1.0 / (10000.0 ** (jnp.arange(0, head_dim, 2, dtype=jnp.float32) / head_dim))
    t = jnp.arange(max_pos, dtype=jnp.float32)
    freqs = jnp.outer(t, inv_freq)
    emb = jnp.concatenate([freqs, freqs], axis=-1)
    cos = jnp.cos(emb)
    sin = jnp.sin(emb)
    half = head_dim // 2
    # fold the rotate_half sign (-1 on the first half) into the sin table once
    sin_rot = jnp.concatenate([-sin[:, :half], sin[:, half:]], axis=-1)

    return dict(
        num_heads=n_heads, inter=inter, eps=1e-6,
        input_ln_w=jnp.ones((hidden,), jnp.float32),      # Int8LlamaRMSNorm init: ones
        post_ln_w=jnp.ones((hidden,), jnp.float32),
        attn_in_scale=attn_in_scale, out_in_scale=out_in_scale,
        mlp_in_scale=mlp_in_scale, down_in_scale=down_in_scale,
        wqkv_t=wqkv_t, qkv_scale=qkv_scale, qkv_bias=qkv_bias,
        wo_t=wo_t, o_scale=o_scale, o_bias=bo.reshape(1, -1),
        wgu_t=wgu_t, gu_scale=gu_scale, gu_bias=gu_bias,
        wd_t=wd_t, d_scale=d_scale, d_bias=bd.reshape(1, -1),
        cos=cos, sin_rot=sin_rot,
    )


if __name__ == "__main__":
    B, S = 2, 8
    N_HEADS, HEAD_DIM = 2, 128        # head_dim=128 (standard Llama) keeps blocks lane-aligned
    HIDDEN = N_HEADS * HEAD_DIM       # 256
    INTER = 512
    MAX_POS = 16

    key = jax.random.PRNGKey(0)
    k_x, k_p = jax.random.split(key)

    params = make_params(k_p, HIDDEN, N_HEADS, INTER, MAX_POS)
    hidden_states = jax.random.normal(k_x, (B, S, HIDDEN), dtype=jnp.float32)

    # HuggingFace-style causal mask: (B, 1, S, S), 0 where visible, finfo.min where masked
    i = jnp.arange(S)[:, None]
    j = jnp.arange(S)[None, :]
    causal = jnp.where(j <= i, 0.0, F32_MIN).astype(jnp.float32)
    attention_mask = jnp.broadcast_to(causal, (B, 1, S, S))
    position_ids = jnp.arange(S, dtype=jnp.int32)

    out = decoder_layer_forward(params, hidden_states, attention_mask, position_ids)
    out = jax.block_until_ready(out)
    assert out.shape == (B, S, HIDDEN) and out.dtype == jnp.float32
    assert bool(jnp.all(jnp.isfinite(out)))
    print("KERNEL_OK")
</pallas_src>

<mosaic_0001>
module attributes {stable_mosaic.version = 11 : i64} {
  func.func @_rmsnorm_quant_kernel(%arg0: i32, %arg1: memref<16x256xf32, #tpu.memory_space<vmem>>, %arg2: memref<1x256xf32, #tpu.memory_space<vmem>>, %arg3: memref<16x256xi8, #tpu.memory_space<vmem>>) attributes {dimension_semantics = [#tpu.dimension_semantics<parallel>], iteration_bounds = array<i64: 1>, scalar_prefetch = 0 : i64, scratch_operands = 0 : i64, tpu.core_type = #tpu.core_type<tc>, window_params = [{transform_indices = @transform_0, window_bounds = array<i64: 16, 256>}, {pipeline_mode = #tpu.pipeline_mode<synchronous>, transform_indices = @transform_1, window_bounds = array<i64: 1, 256>}, {transform_indices = @transform_2, window_bounds = array<i64: 16, 256>}]} {
    %c0 = arith.constant 0 : index
    %c0_0 = arith.constant 0 : index
    %0 = vector.load %arg1[%c0, %c0_0] : memref<16x256xf32, #tpu.memory_space<vmem>>, vector<16x256xf32>
    %1 = arith.mulf %0, %0 : vector<16x256xf32>
    %cst = arith.constant dense<0.000000e+00> : vector<16xf32>
    %2 = vector.multi_reduction <add>, %1, %cst [1] : vector<16x256xf32> to vector<16xf32>
    %3 = vector.shape_cast %2 : vector<16xf32> to vector<16x1xf32>
    %cst_1 = arith.constant 2.560000e+02 : f32
    %4 = vector.broadcast %cst_1 : f32 to vector<16x1xf32>
    %5 = arith.divf %3, %4 : vector<16x1xf32>
    %c0_2 = arith.constant 0 : index
    %c0_3 = arith.constant 0 : index
    %6 = vector.load %arg2[%c0_2, %c0_3] : memref<1x256xf32, #tpu.memory_space<vmem>>, vector<1x256xf32>
    %cst_4 = arith.constant 9.99999997E-7 : f32
    %7 = vector.broadcast %cst_4 : f32 to vector<16x1xf32>
    %8 = arith.addf %5, %7 : vector<16x1xf32>
    %9 = math.rsqrt %8 : vector<16x1xf32>
    %10 = vector.broadcast %9 : vector<16x1xf32> to vector<16x256xf32>
    %11 = arith.mulf %0, %10 : vector<16x256xf32>
    %12 = vector.broadcast %6 : vector<1x256xf32> to vector<16x256xf32>
    %13 = arith.mulf %12, %11 : vector<16x256xf32>
    %cst_5 = arith.constant 2.000000e+01 : f32
    %14 = vector.broadcast %cst_5 : f32 to vector<16x256xf32>
    %15 = arith.mulf %13, %14 : vector<16x256xf32>
    %16 = math.roundeven %15 : vector<16x256xf32>
    %cst_6 = arith.constant -1.280000e+02 : f32
    %cst_7 = arith.constant 1.270000e+02 : f32
    %17 = vector.broadcast %cst_6 : f32 to vector<16x256xf32>
    %18 = arith.maximumf %17, %16 : vector<16x256xf32>
    %19 = vector.broadcast %cst_7 : f32 to vector<16x256xf32>
    %20 = arith.minimumf %19, %18 : vector<16x256xf32>
    %21 = arith.fptosi %20 : vector<16x256xf32> to vector<16x256xi8>
    %c0_8 = arith.constant 0 : index
    %c0_9 = arith.constant 0 : index
    %22 = vector.load %arg3[%c0_8, %c0_9] : memref<16x256xi8, #tpu.memory_space<vmem>>, vector<16x256xi8>
    tpu.vector_store %arg3[%c0_8, %c0_9], %21 {strides = array<i32>} : memref<16x256xi8, #tpu.memory_space<vmem>>, vector<16x256xi8>,
    return
  }
  func.func @transform_0(%arg0: i32) -> (i32, i32) {
    %c0_i32 = arith.constant 0 : i32
    %c0_i32_0 = arith.constant 0 : i32
    return %arg0, %c0_i32 : i32, i32
  }
  func.func @transform_1(%arg0: i32) -> (i32, i32) {
    %c0_i32 = arith.constant 0 : i32
    %c0_i32_0 = arith.constant 0 : i32
    %c0_i32_1 = arith.constant 0 : i32
    return %c0_i32, %c0_i32_0 : i32, i32
  }
  func.func @transform_2(%arg0: i32) -> (i32, i32) {
    %c0_i32 = arith.constant 0 : i32
    %c0_i32_0 = arith.constant 0 : i32
    return %arg0, %c0_i32 : i32, i32
  }
}

</mosaic_0001>

<llo_original>
// kernel: tpu_custom_call.1
$region0: #{tpu_custom_call.1}
  #allocation0 [shape = 'u32[]', space=smem, size = 0x4, offset = 0x4, fixed_abs, tag = 'smem constant byte address 0x4 - core index']
  #allocation1 [shape = 'u32[144,128]{1,0:T(1,128)}', space=vmem, size = 0x12000, scoped, tag = 'internal scratch']
  %s0 = inlined_call_operand.hbm [shape: f32[16,256], index: 0, kind: input, shape index: {}]
  %s1 = inlined_call_operand.vmem [shape: f32[1,256], index: 1, kind: input, shape index: {}]
  %s2 = inlined_call_operand.hbm [shape: s8[16,256], index: 2, kind: output, shape index: {}]
  %s3 = sld [smem:[#allocation0]]
  $region22: #{tpu_custom_call.1} parent=0
    _
  %s5 = ssub.s32 1, %s3
  %s6 = scalar_select 0, %s5, %s3
  $region1: #{tpu_custom_call.1} parent=0
    #allocation2 [shape = 'u8[16384]{0}', space=vmem, size = 0x4000, scoped, tag = 'input window, operand 0, single buffered']
    #allocation3 [shape = 's32[1]{0}', space=sflag, size = 0x4, scoped, tag = 'scoped memory for tpu_custom_call.1']
    #allocation4 [shape = 's32[1]{0}', space=sflag, size = 0x4, scoped, tag = 'scoped memory for tpu_custom_call.1']
    #allocation5 [shape = 'u8[4096]{0}', space=vmem, size = 0x1000, scoped, tag = 'output window, operand 0, single buffered']
    %7 = vsyncpa [#allocation3], 0
    %8 = vsyncpa [#allocation4], 0
    // Predicated region
    $region2: #{tpu_custom_call.1} parent=1 // pred_check
      _
    $region3: #{tpu_custom_call.1} parent=1 // pred_check_branch
      %10 = sbr.rel (0) target = $region5
    $region4: #{tpu_custom_call.1} parent=1 // pred_region
      %s12 = ssub.s32 512, 512
      %13 = vsyncadd [#allocation3], %s12
      %s14 = sshll.u32 [#allocation2], 4
      %s15 = int_to_ptr.vmem [resolvable:$true] %s14
      %20 = dma.hbm_to_vmem [thread:$0]  %s0, 512, %s15, [#allocation3], 256, 256, 16
    $region5: #{tpu_custom_call.1} parent=1 // pred_fallthru
      _
    // Predicated region
    $region6: #{tpu_custom_call.1} parent=1 // pred_check
      _
    $region7: #{tpu_custom_call.1} parent=1 // pred_check_branch
      %22 = sbr.rel (0) target = $region9
    $region8: #{tpu_custom_call.1} parent=1 // pred_region
      _
    $region9: #{tpu_custom_call.1} parent=1 // pred_fallthru
      _
    // Predicated region
    $region10: #{tpu_custom_call.1} parent=1 // pred_check
      _
    $region11: #{tpu_custom_call.1} parent=1 // pred_check_branch
      %24 = sbr.rel (0) target = $region13
    $region12: #{tpu_custom_call.1} parent=1 // pred_region
      %25 = dma.done [#allocation3], 512
    $region13: #{tpu_custom_call.1} parent=1 // pred_fallthru
      _
    %v26 = vld [vmem:[#allocation2] sm:$0xff]
    %v27 = vld [vmem:[#allocation2 + $0x8] sm:$0xff]
    %v28 = vld [vmem:[#allocation2 + $0x10] sm:$0xff]
    %v29 = vld [vmem:[#allocation2 + $0x18] sm:$0xff]
    %v30 = vmul.f32 %v26, %v26
    %v31 = vmul.f32 %v27, %v27
    %v32 = vmul.f32 %v28, %v28
    %v33 = vmul.f32 %v29, %v29
    %v34 = vadd.f32 %v30, %v31
    %35 = vadd.xlane.f32.xlu0 %v34
    %v36 = vpop.xlane.xlu0 %35
    %v37 = vadd.f32 %v32, %v33
    %38 = vadd.xlane.f32.xlu0 %v37
    %v39 = vpop.xlane.xlu0 %38
    %v40 = vrcp.pop 256.0
    %v41 = vmul.f32 %v36, %v40
    %v42 = vmul.f32 %v39, %v40
    %v43 = vld [vmem:[%s1] sm:$0x3]
    %v44 = vadd.f32 %v41, 1e-06
    %v45 = vadd.f32 %v42, 1e-06
    %v46 = vrsqrt.pop %v44
    %v47 = vrsqrt.pop %v45
    %v48 = vmul.f32 %v26, %v46
    %v49 = vmul.f32 %v27, %v46
    %v50 = vmul.f32 %v28, %v47
    %v51 = vmul.f32 %v29, %v47
    %v53 = vlaneseq
    %v54 = vshrl.u32 %v53, 7
    %v55 = vsub.s32 0, %v54
    %v56 = vrot.slane %v43, %v55
    %v57 = vlaneseq
    %v58 = vshrl.u32 %v57, 7
    %v59 = vsub.s32 1, %v58
    %v60 = vrot.slane %v43, %v59
    %v63 = vmul.f32 %v56, %v48
    %v64 = vmul.f32 %v60, %v49
    %v65 = vmul.f32 %v56, %v50
    %v66 = vmul.f32 %v60, %v51
    %v67 = vmul.f32 %v63, 20.0
    %v68 = vmul.f32 %v64, 20.0
    %v69 = vmul.f32 %v65, 20.0
    %v70 = vmul.f32 %v66, 20.0
    %v71 = vround.ne.pseudo %v67
    %v72 = vround.ne.pseudo %v68
    %v73 = vround.ne.pseudo %v69
    %v74 = vround.ne.pseudo %v70
    %v75 = vmax.f32 %v71, -128.0
    %v76 = vmax.f32 %v72, -128.0
    %v77 = vmax.f32 %v73, -128.0
    %v78 = vmax.f32 %v74, -128.0
    %v79 = vmin.f32 %v75, 127.0
    %v80 = vmin.f32 %v76, 127.0
    %v81 = vmin.f32 %v77, 127.0
    %v82 = vmin.f32 %v78, 127.0
    %v83 = vtrunc.f32 %v79
    %v84 = vtrunc.f32 %v80
    %v85 = vtrunc.f32 %v81
    %v86 = vtrunc.f32 %v82
    %v87 = vpack.c.f32.eXmY %v83, %v85, 312
    %v91 = vpack.c.b8 %v87, %v87
    %v93 = vpack.c.f32.eXmY %v84, %v86, 312
    %v97 = vpack.c.b8 %v93, %v93
    %v99 = vunpack.c.0.s8 %v91
    %v100 = vunpack.c.0.s8 %v97
    %v101 = vunpack.c.1.s8 %v91
    %v102 = vunpack.c.1.s8 %v97
    %v103 = vpack.c.b16 %v100, %v99
    %v104 = vpack.c.b8 %v103, %v103
    %v105 = vpack.c.b16 %v102, %v101
    %v106 = vpack.c.b8 %v105, %v105
    %107 = vst [vmem:[#allocation5] sm:$0xf] %v104
    %108 = vst [vmem:[#allocation5 + $0x4] sm:$0xf] %v106
    // Predicated region
    $region14: #{tpu_custom_call.1} parent=1 // pred_check
      _
    $region15: #{tpu_custom_call.1} parent=1 // pred_check_branch
      %110 = sbr.rel (0) target = $region17
    $region16: #{tpu_custom_call.1} parent=1 // pred_region
      %s112 = ssub.s32 128, 128
      %113 = vsyncadd [#allocation4], %s112
      %s114 = sshll.u32 [#allocation5], 4
      %s115 = int_to_ptr.vmem [resolvable:$true] %s114
      %120 = dma.vmem_to_hbm [thread:$0]  %s115, 128, %s2, [#allocation4], 64, 64, 4
    $region17: #{tpu_custom_call.1} parent=1 // pred_fallthru
      _
    // Predicated region
    $region18: #{tpu_custom_call.1} parent=1 // pred_check
      _
    $region19: #{tpu_custom_call.1} parent=1 // pred_check_branch
      %122 = sbr.rel (0) target = $region21
    $region20: #{tpu_custom_call.1} parent=1 // pred_region
      %123 = dma.done [#allocation4], 128
    $region21: #{tpu_custom_call.1} parent=1 // pred_fallthru
      _
    %124 = vsyncpa [#allocation3], 1
    %125 = vsyncpa [#allocation4], 1

</llo_original>
